<compile_context>
chip_gen: v5e
topology: v5e:2x2
jax: 0.10.0
libtpu: 0.0.40
codegen_flags: <defaults>
</compile_context>

<pallas_src>
import jax
import jax.numpy as jnp
from jax.experimental import pallas as pl
from jax.experimental.pallas import tpu as pltpu


def _round_up(n, m):
    return ((n + m - 1) // m) * m


def bow_bilstm_kernel(ids_ref,     # (TB, S)      int32 token ids for this batch tile
                      table_ref,   # (Vp, 2*Dp)   fused embedding table [bow | seq]
                      wg_ref,      # (Dp, 6*Hp)   gate weights [i_f|i_b | g_f|g_b | o_f|o_b]
                      bg_ref,      # (1, 6*Hp)    gate biases (b_ih + b_hh, forget trimmed)
                      wp_ref,      # (2*Hp, Dp)   fused 2H->D projection (pre-transposed)
                      bp_ref,      # (1, Dp)      projection bias
                      out_ref):    # (TB, Dp)
    tb, s_len = ids_ref.shape
    vp = table_ref.shape[0]
    dp = out_ref.shape[-1]
    hp2 = wp_ref.shape[0]                      # 2 * Hp

    # ---- EmbeddingBag(mode='sum') on the VMEM-resident fused table ----
    # counts[b, v] = #{s : ids[b, s] == v};  bag sum == counts @ table (MXU).
    ids = ids_ref[...]
    iota_v = jax.lax.broadcasted_iota(jnp.int32, (tb, vp), 1)
    counts = jnp.zeros((tb, vp), jnp.float32)
    for s in range(s_len):                     # static unroll; S is small here.
        counts = counts + (ids[:, s:s + 1] == iota_v).astype(jnp.float32)
    pooled = jnp.dot(counts, table_ref[...],
                     preferred_element_type=jnp.float32)          # (TB, 2*Dp)
    bow = pooled[:, :dp]                       # BOW branch
    seq = pooled[:, dp:]                       # pooled input to the Bilstm branch

    # ---- single-step bidirectional LSTM (c0 = 0 => c = i*g, forget gate dead) ----
    gates = (jnp.dot(seq, wg_ref[...], preferred_element_type=jnp.float32)
             + bg_ref[...])                    # (TB, 6*Hp)
    i = jax.nn.sigmoid(gates[:, 0 * hp2:1 * hp2])    # [i_f | i_b]
    g = jnp.tanh(gates[:, 1 * hp2:2 * hp2])          # [g_f | g_b]
    o = jax.nn.sigmoid(gates[:, 2 * hp2:3 * hp2])    # [o_f | o_b]
    h = o * jnp.tanh(i * g)                    # (TB, 2*Hp) = [h_fwd | h_bwd]

    proj = (jnp.dot(h, wp_ref[...], preferred_element_type=jnp.float32)
            + bp_ref[...])                     # (TB, Dp)

    out_ref[...] = ((bow + proj) * 0.5).astype(out_ref.dtype)


def pack_params(params, lane=128, weight_dtype=jnp.float32):
    """One-time layout plumbing: fuse the two embedding tables, trim the dead
    forget gate, reorder gate bands to [i_f|i_b|g_f|g_b|o_f|o_b], fuse the
    projection halves, pre-transpose weights and pad feature axes to 128."""
    V, D = params["emb_bow"].shape
    H = params["wih_f"].shape[0] // 4
    Dp = _round_up(D, lane)
    Hp = _round_up(H, lane)
    Vp = _round_up(V, 8)

    def pad_to(a, rows, cols):
        return jnp.pad(a, ((0, rows - a.shape[0]), (0, cols - a.shape[1])))

    # Fused (Vp, 2*Dp) table: row v = [emb_bow[v] (padded) | emb_seq[v] (padded)].
    table = jnp.concatenate(
        [pad_to(params["emb_bow"], Vp, Dp), pad_to(params["emb_seq"], Vp, Dp)],
        axis=1)

    def gate(wih, gi):               # PyTorch gate order (i, f, g, o); f is dead.
        return pad_to(wih[gi * H:(gi + 1) * H, :].T, Dp, Hp)       # (Dp, Hp)

    def bias(b, gi):
        return jnp.pad(b[:, gi * H:(gi + 1) * H], ((0, 0), (0, Hp - H)))

    wf, wb = params["wih_f"], params["wih_b"]
    bf, bb = params["b_f"], params["b_b"]
    wg = jnp.concatenate([gate(wf, 0), gate(wb, 0),
                          gate(wf, 2), gate(wb, 2),
                          gate(wf, 3), gate(wb, 3)], axis=1)       # (Dp, 6*Hp)
    bg = jnp.concatenate([bias(bf, 0), bias(bb, 0),
                          bias(bf, 2), bias(bb, 2),
                          bias(bf, 3), bias(bb, 3)], axis=1)       # (1, 6*Hp)

    wproj = params["wproj"]                                        # (D, 2H)
    wp = jnp.concatenate([pad_to(wproj[:, 0:H].T, Hp, Dp),
                          pad_to(wproj[:, H:2 * H].T, Hp, Dp)], axis=0)  # (2*Hp, Dp)
    bp = jnp.pad(params["bproj"], ((0, 0), (0, Dp - D)))           # (1, Dp)

    return {"table": table.astype(jnp.float32),
            "wg": wg.astype(weight_dtype), "bg": bg.astype(jnp.float32),
            "wp": wp.astype(weight_dtype), "bp": bp.astype(jnp.float32),
            "D": D, "Dp": Dp, "Hp": Hp}


def bow_bilstm_forward(x, packed, tb=None):
    B, S = x.shape
    D, Dp, Hp = packed["D"], packed["Dp"], packed["Hp"]
    Vp = packed["table"].shape[0]

    if tb is None:
        # >= 2 batch tiles (keeps both v7x TensorCores busy), capped at 256 MXU rows.
        tb = max(8, min(256, (_round_up(B, 8) // 2) // 8 * 8)) if B >= 16 else 8
    B_pad = _round_up(B, tb)
    x_ids = x.astype(jnp.int32)
    if B_pad != B:
        x_ids = jnp.pad(x_ids, ((0, B_pad - B), (0, 0)))   # padded rows sliced off below
    num_tiles = B_pad // tb

    def fixed(shape):       # constant-index (resident) weight block
        return pl.BlockSpec(shape, lambda t, _n=len(shape): (0,) * _n)

    grid_spec = pltpu.PrefetchScalarGridSpec(
        num_scalar_prefetch=0,
        grid=(num_tiles,),
        in_specs=[
            pl.BlockSpec((tb, S), lambda t: (t, 0)),   # token ids for this batch tile
            fixed((Vp, 2 * Dp)),                       # fused embedding table (resident)
            fixed((Dp, 6 * Hp)),                       # gate weights
            fixed((1, 6 * Hp)),                        # gate biases
            fixed((2 * Hp, Dp)),                       # fused projection
            fixed((1, Dp)),                            # projection bias
        ],
        out_specs=pl.BlockSpec((tb, Dp), lambda t: (t, 0)),
    )

    out = pl.pallas_call(
        bow_bilstm_kernel,
        out_shape=jax.ShapeDtypeStruct((B_pad, Dp), jnp.float32),
        grid_spec=grid_spec,
        compiler_params=pltpu.CompilerParams(
            dimension_semantics=("parallel",)),        # batch tiles across TensorCores
    )(x_ids, packed["table"], packed["wg"], packed["bg"],
      packed["wp"], packed["bp"])

    # NOTE: at realistic sizes, fuse this un-pad slice into the consumer's jit.
    return out[:B, :D]


def init_params(key, vocab_size, embedding_dim, bilstm_hidden_dim):
    V, D, H = vocab_size, embedding_dim, bilstm_hidden_dim
    ks = jax.random.split(key, 8)
    s = 0.1
    return {
        "emb_bow": jax.random.normal(ks[0], (V, D), jnp.float32) * s,
        "emb_seq": jax.random.normal(ks[1], (V, D), jnp.float32) * s,
        "wih_f": jax.random.normal(ks[2], (4 * H, D), jnp.float32) * s,
        "b_f": jax.random.normal(ks[3], (1, 4 * H), jnp.float32) * s,   # b_ih + b_hh
        "wih_b": jax.random.normal(ks[4], (4 * H, D), jnp.float32) * s,
        "b_b": jax.random.normal(ks[5], (1, 4 * H), jnp.float32) * s,
        "wproj": jax.random.normal(ks[6], (D, 2 * H), jnp.float32) * s,
        "bproj": jax.random.normal(ks[7], (1, D), jnp.float32) * s,
    }


def reference(x, p):
    """Pure-JAX reference of the same math, for a correctness check."""
    V = p["emb_bow"].shape[0]
    H = p["wih_f"].shape[0] // 4
    counts = jax.nn.one_hot(x, V, dtype=jnp.float32).sum(axis=1)
    bow = counts @ p["emb_bow"]
    seq = counts @ p["emb_seq"]

    def step(wih, b):
        g = seq @ wih.T + b
        i, f, gg, o = (g[:, 0:H], g[:, H:2 * H], g[:, 2 * H:3 * H], g[:, 3 * H:4 * H])
        c = jax.nn.sigmoid(i) * jnp.tanh(gg)      # f * c0 == 0
        return jax.nn.sigmoid(o) * jnp.tanh(c)

    h = jnp.concatenate([step(p["wih_f"], p["b_f"]),
                         step(p["wih_b"], p["b_b"])], axis=-1)
    proj = h @ p["wproj"].T + p["bproj"]
    return (bow + proj) / 2.0


if __name__ == "__main__":
    B, S = 16, 8                # batch, tokens per bag
    V, D, H = 128, 32, 16       # vocab, embedding_dim, bilstm_hidden_dim

    key = jax.random.PRNGKey(0)
    kx, kp = jax.random.split(key)
    x = jax.random.randint(kx, (B, S), 0, V, dtype=jnp.int32)
    params = init_params(kp, V, D, H)
    packed = pack_params(params)

    out = jax.block_until_ready(bow_bilstm_forward(x, packed))
    ref = jax.block_until_ready(reference(x, params))

    assert out.shape == (B, D)
    assert jnp.allclose(out, ref, rtol=1e-5, atol=1e-5)
    print("KERNEL_OK")
</pallas_src>

<mosaic_0001>
module attributes {stable_mosaic.version = 11 : i64} {
  func.func @bow_bilstm_kernel(%arg0: i32, %arg1: memref<8x8xi32, #tpu.memory_space<vmem>>, %arg2: memref<128x256xf32, #tpu.memory_space<vmem>>, %arg3: memref<128x768xf32, #tpu.memory_space<vmem>>, %arg4: memref<1x768xf32, #tpu.memory_space<vmem>>, %arg5: memref<256x128xf32, #tpu.memory_space<vmem>>, %arg6: memref<1x128xf32, #tpu.memory_space<vmem>>, %arg7: memref<8x128xf32, #tpu.memory_space<vmem>>) attributes {dimension_semantics = [#tpu.dimension_semantics<parallel>], iteration_bounds = array<i64: 2>, scalar_prefetch = 0 : i64, scratch_operands = 0 : i64, tpu.core_type = #tpu.core_type<tc>, window_params = [{transform_indices = @transform_0, window_bounds = array<i64: 8, 8>}, {pipeline_mode = #tpu.pipeline_mode<synchronous>, transform_indices = @transform_1, window_bounds = array<i64: 128, 256>}, {pipeline_mode = #tpu.pipeline_mode<synchronous>, transform_indices = @transform_2, window_bounds = array<i64: 128, 768>}, {pipeline_mode = #tpu.pipeline_mode<synchronous>, transform_indices = @transform_3, window_bounds = array<i64: 1, 768>}, {pipeline_mode = #tpu.pipeline_mode<synchronous>, transform_indices = @transform_4, window_bounds = array<i64: 256, 128>}, {pipeline_mode = #tpu.pipeline_mode<synchronous>, transform_indices = @transform_5, window_bounds = array<i64: 1, 128>}, {transform_indices = @transform_6, window_bounds = array<i64: 8, 128>}]} {
    %c0 = arith.constant 0 : index
    %c0_0 = arith.constant 0 : index
    %0 = vector.load %arg1[%c0, %c0_0] : memref<8x8xi32, #tpu.memory_space<vmem>>, vector<8x8xi32>
    %1 = tpu.iota {dimensions = array<i32: 1>} : vector<8x128xi32>
    %cst = arith.constant 0.000000e+00 : f32
    %2 = vector.broadcast %cst : f32 to vector<8x128xf32>
    %3 = vector.extract_strided_slice %0 {offsets = [0, 0], sizes = [8, 1], strides = [1, 1]} : vector<8x8xi32> to vector<8x1xi32>
    %4 = vector.broadcast %3 : vector<8x1xi32> to vector<8x128xi32>
    %5 = arith.cmpi eq, %4, %1 : vector<8x128xi32>
    %6 = arith.extui %5 : vector<8x128xi1> to vector<8x128xi32>
    %7 = arith.sitofp %6 : vector<8x128xi32> to vector<8x128xf32>
    %8 = arith.addf %2, %7 : vector<8x128xf32>
    %9 = vector.extract_strided_slice %0 {offsets = [0, 1], sizes = [8, 1], strides = [1, 1]} : vector<8x8xi32> to vector<8x1xi32>
    %10 = vector.broadcast %9 : vector<8x1xi32> to vector<8x128xi32>
    %11 = arith.cmpi eq, %10, %1 : vector<8x128xi32>
    %12 = arith.extui %11 : vector<8x128xi1> to vector<8x128xi32>
    %13 = arith.sitofp %12 : vector<8x128xi32> to vector<8x128xf32>
    %14 = arith.addf %8, %13 : vector<8x128xf32>
    %15 = vector.extract_strided_slice %0 {offsets = [0, 2], sizes = [8, 1], strides = [1, 1]} : vector<8x8xi32> to vector<8x1xi32>
    %16 = vector.broadcast %15 : vector<8x1xi32> to vector<8x128xi32>
    %17 = arith.cmpi eq, %16, %1 : vector<8x128xi32>
    %18 = arith.extui %17 : vector<8x128xi1> to vector<8x128xi32>
    %19 = arith.sitofp %18 : vector<8x128xi32> to vector<8x128xf32>
    %20 = arith.addf %14, %19 : vector<8x128xf32>
    %21 = vector.extract_strided_slice %0 {offsets = [0, 3], sizes = [8, 1], strides = [1, 1]} : vector<8x8xi32> to vector<8x1xi32>
    %22 = vector.broadcast %21 : vector<8x1xi32> to vector<8x128xi32>
    %23 = arith.cmpi eq, %22, %1 : vector<8x128xi32>
    %24 = arith.extui %23 : vector<8x128xi1> to vector<8x128xi32>
    %25 = arith.sitofp %24 : vector<8x128xi32> to vector<8x128xf32>
    %26 = arith.addf %20, %25 : vector<8x128xf32>
    %27 = vector.extract_strided_slice %0 {offsets = [0, 4], sizes = [8, 1], strides = [1, 1]} : vector<8x8xi32> to vector<8x1xi32>
    %28 = vector.broadcast %27 : vector<8x1xi32> to vector<8x128xi32>
    %29 = arith.cmpi eq, %28, %1 : vector<8x128xi32>
    %30 = arith.extui %29 : vector<8x128xi1> to vector<8x128xi32>
    %31 = arith.sitofp %30 : vector<8x128xi32> to vector<8x128xf32>
    %32 = arith.addf %26, %31 : vector<8x128xf32>
    %33 = vector.extract_strided_slice %0 {offsets = [0, 5], sizes = [8, 1], strides = [1, 1]} : vector<8x8xi32> to vector<8x1xi32>
    %34 = vector.broadcast %33 : vector<8x1xi32> to vector<8x128xi32>
    %35 = arith.cmpi eq, %34, %1 : vector<8x128xi32>
    %36 = arith.extui %35 : vector<8x128xi1> to vector<8x128xi32>
    %37 = arith.sitofp %36 : vector<8x128xi32> to vector<8x128xf32>
    %38 = arith.addf %32, %37 : vector<8x128xf32>
    %39 = vector.extract_strided_slice %0 {offsets = [0, 6], sizes = [8, 1], strides = [1, 1]} : vector<8x8xi32> to vector<8x1xi32>
    %40 = vector.broadcast %39 : vector<8x1xi32> to vector<8x128xi32>
    %41 = arith.cmpi eq, %40, %1 : vector<8x128xi32>
    %42 = arith.extui %41 : vector<8x128xi1> to vector<8x128xi32>
    %43 = arith.sitofp %42 : vector<8x128xi32> to vector<8x128xf32>
    %44 = arith.addf %38, %43 : vector<8x128xf32>
    %45 = vector.extract_strided_slice %0 {offsets = [0, 7], sizes = [8, 1], strides = [1, 1]} : vector<8x8xi32> to vector<8x1xi32>
    %46 = vector.broadcast %45 : vector<8x1xi32> to vector<8x128xi32>
    %47 = arith.cmpi eq, %46, %1 : vector<8x128xi32>
    %48 = arith.extui %47 : vector<8x128xi1> to vector<8x128xi32>
    %49 = arith.sitofp %48 : vector<8x128xi32> to vector<8x128xf32>
    %50 = arith.addf %44, %49 : vector<8x128xf32>
    %c0_1 = arith.constant 0 : index
    %c0_2 = arith.constant 0 : index
    %51 = vector.load %arg2[%c0_1, %c0_2] : memref<128x256xf32, #tpu.memory_space<vmem>>, vector<128x256xf32>
    %cst_3 = arith.constant dense<0.000000e+00> : vector<8x256xf32>
    %52 = tpu.matmul %50, %51, %cst_3 {dimension_numbers = #tpu.dot_dimension_numbers<[1], [0], [0], [1], [0, 0, 1, 1], [], []>} : vector<8x128xf32>, vector<128x256xf32>, vector<8x256xf32> -> vector<8x256xf32>
    %53 = vector.extract_strided_slice %52 {offsets = [0, 0], sizes = [8, 128], strides = [1, 1]} : vector<8x256xf32> to vector<8x128xf32>
    %54 = vector.extract_strided_slice %52 {offsets = [0, 128], sizes = [8, 128], strides = [1, 1]} : vector<8x256xf32> to vector<8x128xf32>
    %c0_4 = arith.constant 0 : index
    %c0_5 = arith.constant 0 : index
    %55 = vector.load %arg3[%c0_4, %c0_5] : memref<128x768xf32, #tpu.memory_space<vmem>>, vector<128x768xf32>
    %cst_6 = arith.constant dense<0.000000e+00> : vector<8x768xf32>
    %56 = tpu.matmul %54, %55, %cst_6 {dimension_numbers = #tpu.dot_dimension_numbers<[1], [0], [0], [1], [0, 0, 1, 1], [], []>} : vector<8x128xf32>, vector<128x768xf32>, vector<8x768xf32> -> vector<8x768xf32>
    %c0_7 = arith.constant 0 : index
    %c0_8 = arith.constant 0 : index
    %57 = vector.load %arg4[%c0_7, %c0_8] : memref<1x768xf32, #tpu.memory_space<vmem>>, vector<1x768xf32>
    %58 = vector.broadcast %57 : vector<1x768xf32> to vector<8x768xf32>
    %59 = arith.addf %56, %58 : vector<8x768xf32>
    %60 = vector.extract_strided_slice %59 {offsets = [0, 0], sizes = [8, 256], strides = [1, 1]} : vector<8x768xf32> to vector<8x256xf32>
    %61 = arith.negf %60 : vector<8x256xf32>
    %62 = math.exp %61 : vector<8x256xf32>
    %cst_9 = arith.constant 1.000000e+00 : f32
    %63 = vector.broadcast %cst_9 : f32 to vector<8x256xf32>
    %64 = arith.addf %63, %62 : vector<8x256xf32>
    %65 = arith.divf %63, %64 : vector<8x256xf32>
    %66 = vector.extract_strided_slice %59 {offsets = [0, 256], sizes = [8, 256], strides = [1, 1]} : vector<8x768xf32> to vector<8x256xf32>
    %67 = math.tanh %66 : vector<8x256xf32>
    %68 = vector.extract_strided_slice %59 {offsets = [0, 512], sizes = [8, 256], strides = [1, 1]} : vector<8x768xf32> to vector<8x256xf32>
    %69 = arith.negf %68 : vector<8x256xf32>
    %70 = math.exp %69 : vector<8x256xf32>
    %cst_10 = arith.constant 1.000000e+00 : f32
    %71 = vector.broadcast %cst_10 : f32 to vector<8x256xf32>
    %72 = arith.addf %71, %70 : vector<8x256xf32>
    %73 = arith.divf %71, %72 : vector<8x256xf32>
    %74 = arith.mulf %65, %67 : vector<8x256xf32>
    %75 = math.tanh %74 : vector<8x256xf32>
    %76 = arith.mulf %73, %75 : vector<8x256xf32>
    %c0_11 = arith.constant 0 : index
    %c0_12 = arith.constant 0 : index
    %77 = vector.load %arg5[%c0_11, %c0_12] : memref<256x128xf32, #tpu.memory_space<vmem>>, vector<256x128xf32>
    %cst_13 = arith.constant dense<0.000000e+00> : vector<8x128xf32>
    %78 = tpu.matmul %76, %77, %cst_13 {dimension_numbers = #tpu.dot_dimension_numbers<[1], [0], [0], [1], [0, 0, 1, 1], [], []>} : vector<8x256xf32>, vector<256x128xf32>, vector<8x128xf32> -> vector<8x128xf32>
    %c0_14 = arith.constant 0 : index
    %c0_15 = arith.constant 0 : index
    %79 = vector.load %arg6[%c0_14, %c0_15] : memref<1x128xf32, #tpu.memory_space<vmem>>, vector<1x128xf32>
    %80 = vector.broadcast %79 : vector<1x128xf32> to vector<8x128xf32>
    %81 = arith.addf %78, %80 : vector<8x128xf32>
    %82 = arith.addf %53, %81 : vector<8x128xf32>
    %cst_16 = arith.constant 5.000000e-01 : f32
    %83 = vector.broadcast %cst_16 : f32 to vector<8x128xf32>
    %84 = arith.mulf %82, %83 : vector<8x128xf32>
    %c0_17 = arith.constant 0 : index
    %c0_18 = arith.constant 0 : index
    %85 = vector.load %arg7[%c0_17, %c0_18] : memref<8x128xf32, #tpu.memory_space<vmem>>, vector<8x128xf32>
    tpu.vector_store %arg7[%c0_17, %c0_18], %84 {strides = array<i32>} : memref<8x128xf32, #tpu.memory_space<vmem>>, vector<8x128xf32>,
    return
  }
  func.func @transform_0(%arg0: i32) -> (i32, i32) {
    %c0_i32 = arith.constant 0 : i32
    %c0_i32_0 = arith.constant 0 : i32
    return %arg0, %c0_i32 : i32, i32
  }
  func.func @transform_1(%arg0: i32) -> (i32, i32) {
    %c0_i32 = arith.constant 0 : i32
    %c0_i32_0 = arith.constant 0 : i32
    %c0_i32_1 = arith.constant 0 : i32
    return %c0_i32, %c0_i32_0 : i32, i32
  }
  func.func @transform_2(%arg0: i32) -> (i32, i32) {
    %c0_i32 = arith.constant 0 : i32
    %c0_i32_0 = arith.constant 0 : i32
    %c0_i32_1 = arith.constant 0 : i32
    return %c0_i32, %c0_i32_0 : i32, i32
  }
  func.func @transform_3(%arg0: i32) -> (i32, i32) {
    %c0_i32 = arith.constant 0 : i32
    %c0_i32_0 = arith.constant 0 : i32
    %c0_i32_1 = arith.constant 0 : i32
    return %c0_i32, %c0_i32_0 : i32, i32
  }
  func.func @transform_4(%arg0: i32) -> (i32, i32) {
    %c0_i32 = arith.constant 0 : i32
    %c0_i32_0 = arith.constant 0 : i32
    %c0_i32_1 = arith.constant 0 : i32
    return %c0_i32, %c0_i32_0 : i32, i32
  }
  func.func @transform_5(%arg0: i32) -> (i32, i32) {
    %c0_i32 = arith.constant 0 : i32
    %c0_i32_0 = arith.constant 0 : i32
    %c0_i32_1 = arith.constant 0 : i32
    return %c0_i32, %c0_i32_0 : i32, i32
  }
  func.func @transform_6(%arg0: i32) -> (i32, i32) {
    %c0_i32 = arith.constant 0 : i32
    %c0_i32_0 = arith.constant 0 : i32
    return %arg0, %c0_i32 : i32, i32
  }
}

</mosaic_0001>

<llo_original>
// kernel: tpu_custom_call.1
$region0: #{tpu_custom_call.1}
  #allocation0 [shape = 'u32[]', space=smem, size = 0x4, offset = 0x4, fixed_abs, tag = 'smem constant byte address 0x4 - core index']
  #allocation1 [shape = 'u32[72,128]{1,0:T(1,128)}', space=vmem, size = 0x9000, scoped, tag = 'internal scratch']
  %s0 = inlined_call_operand.vmem [shape: s32[16,8], index: 0, kind: input, shape index: {}]
  %s1 = inlined_call_operand.hbm [shape: f32[128,256], index: 1, kind: input, shape index: {}]
  %s2 = inlined_call_operand.hbm [shape: f32[128,768], index: 2, kind: input, shape index: {}]
  %s3 = inlined_call_operand.vmem [shape: f32[1,768], index: 3, kind: input, shape index: {}]
  %s4 = inlined_call_operand.hbm [shape: f32[256,128], index: 4, kind: input, shape index: {}]
  %s5 = inlined_call_operand.vmem [shape: f32[1,128], index: 5, kind: input, shape index: {}]
  %s6 = inlined_call_operand.hbm [shape: f32[16,128], index: 6, kind: output, shape index: {}]
  %s7 = sld [smem:[#allocation0]]
  $region69: #{tpu_custom_call.1} parent=0
    _
  %s9 = ssub.s32 1, %s7
  %s10 = scalar_select 0, %s9, %s7
  $region1: #{tpu_custom_call.1} parent=0
    #allocation2 [shape = 'u8[131072]{0}', space=vmem, size = 0x20000, scoped, tag = 'input window, operand 1, single buffered']
    #allocation3 [shape = 's32[2]{0}', space=sflag, size = 0x8, scoped, tag = 'scoped memory for tpu_custom_call.1']
    #allocation4 [shape = 's32[2]{0}', space=sflag, size = 0x8, scoped, tag = 'scoped memory for tpu_custom_call.1']
    #allocation5 [shape = 'u8[393216]{0}', space=vmem, size = 0x60000, scoped, tag = 'input window, operand 2, single buffered']
    #allocation6 [shape = 's32[1]{0}', space=sflag, size = 0x4, scoped, tag = 'scoped memory for tpu_custom_call.1']
    #allocation7 [shape = 'u8[131072]{0}', space=vmem, size = 0x20000, scoped, tag = 'input window, operand 4, single buffered']
    #allocation8 [shape = 'u8[8192]{0}', space=vmem, size = 0x2000, scoped, tag = 'output window, operand 0']
    %11 = vsyncpa [#allocation3], 0
    %12 = vsyncpa [#allocation6], 0
    %13 = vsyncpa [#allocation4], 0
    %s14 = scalar_lea.sflag [#allocation4], 1
    %15 = vsyncpa %s14, 0
    loop: start=0, step=1, limit=4
    $region2: #{tpu_custom_call.1} parent=1 // loop_pre_header
      _
    $region3: #{tpu_custom_call.1} parent=1 // loop_header
      %s17 = sphi 0, %s21
      %p18 = scmp.ge.s32.totalorder %s17, 4
      %s27 = sphi 0, %s29
      %s30 = sphi 0, %s27
      %s31 = sphi 0, %s30
      %s47 = sphi 0, %s31
      %s51 = sphi 0, %s51
      %s53 = sphi 0, %s51
      %s54 = sphi 0, %s53
      %s68 = sphi 0, %s54
      %s72 = sphi 0, %s72
      %s74 = sphi 0, %s72
      %s75 = sphi 0, %s74
      %s89 = sphi 0, %s75
      %s93 = sphi 0, %s93
      %s95 = sphi 0, %s93
      %s96 = sphi 0, %s95
      %s110 = sphi 0, %s96
      %s114 = sphi 0, %s114
      %s116 = sphi 0, %s114
      %s117 = sphi 0, %s116
      %s131 = sphi 0, %s117
      %s135 = sphi 0, %s135
      %s137 = sphi 0, %s135
      %s138 = sphi 0, %s137
      %s152 = sphi 0, %s138
      %s158 = sphi 0, %s160
      %s161 = sphi 0, %s158
      %s162 = sphi 0, %s161
      %s178 = sphi 0, %s162
    $region4: #{tpu_custom_call.1} parent=1 // loop_header_branch
      %20 = sbr.rel (%p18) target = $region8
    $region5: #{tpu_custom_call.1} parent=1 // loop_body
      %s22 = ssub.s32 %s17, 1
      %s23 = ssub.s32 %s17, 2
      %s24 = sadd.s32 %s17, 1
      %s25 = ssub.s32 %s17, %s24
      %p26 = scmp.eq.s32.totalorder %s25, 0
      %s28 = sadd.s32 %s27, 1
      %s29 = scalar_select %p26, %s27, %s28
      %p32 = pneg %p26
      %p33 = scmp.eq.s32.totalorder %s17, 1
      %p34 = por %p32, %p33
      %p35 = scmp.ne.s32.totalorder %s27, %s30
      %p36 = scmp.eq.s32.totalorder %s17, 0
      %p37 = por %p35, %p36
      %p38 = scmp.ne.s32.totalorder %s27, %s30
      %p39 = scmp.eq.s32.totalorder %s22, 1
      %p40 = por %p38, %p39
      %p41 = scmp.ne.s32.totalorder %s30, %s31
      %p42 = scmp.eq.s32.totalorder %s22, 0
      %p43 = por %p41, %p42
      %p44 = scmp.ne.s32.totalorder %s30, %s31
      %p45 = scmp.eq.s32.totalorder %s23, 1
      %p46 = por %p44, %p45
      %p48 = scmp.ne.s32.totalorder %s31, %s47
      %p49 = scmp.eq.s32.totalorder %s23, 0
      %p50 = por %p48, %p49
      %s52 = sadd.s32 %s51, 1
      %p55 = scmp.eq.s32.totalorder %s17, 1
      %p56 = scmp.ne.s32.totalorder %s51, %s53
      %p57 = scmp.eq.s32.totalorder %s17, 0
      %p58 = por %p56, %p57
      %p59 = scmp.ne.s32.totalorder %s51, %s53
      %p60 = scmp.eq.s32.totalorder %s22, 1
      %p61 = por %p59, %p60
      %p62 = scmp.ne.s32.totalorder %s53, %s54
      %p63 = scmp.eq.s32.totalorder %s22, 0
      %p64 = por %p62, %p63
      %p65 = scmp.ne.s32.totalorder %s53, %s54
      %p66 = scmp.eq.s32.totalorder %s23, 1
      %p67 = por %p65, %p66
      %p69 = scmp.ne.s32.totalorder %s54, %s68
      %p70 = scmp.eq.s32.totalorder %s23, 0
      %p71 = por %p69, %p70
      %s73 = sadd.s32 %s72, 1
      %p76 = scmp.eq.s32.totalorder %s17, 1
      %p77 = scmp.ne.s32.totalorder %s72, %s74
      %p78 = scmp.eq.s32.totalorder %s17, 0
      %p79 = por %p77, %p78
      %p80 = scmp.ne.s32.totalorder %s72, %s74
      %p81 = scmp.eq.s32.totalorder %s22, 1
      %p82 = por %p80, %p81
      %p83 = scmp.ne.s32.totalorder %s74, %s75
      %p84 = scmp.eq.s32.totalorder %s22, 0
      %p85 = por %p83, %p84
      %p86 = scmp.ne.s32.totalorder %s74, %s75
      %p87 = scmp.eq.s32.totalorder %s23, 1
      %p88 = por %p86, %p87
      %p90 = scmp.ne.s32.totalorder %s75, %s89
      %p91 = scmp.eq.s32.totalorder %s23, 0
      %p92 = por %p90, %p91
      %s94 = sadd.s32 %s93, 1
      %p97 = scmp.eq.s32.totalorder %s17, 1
      %p98 = scmp.ne.s32.totalorder %s93, %s95
      %p99 = scmp.eq.s32.totalorder %s17, 0
      %p100 = por %p98, %p99
      %p101 = scmp.ne.s32.totalorder %s93, %s95
      %p102 = scmp.eq.s32.totalorder %s22, 1
      %p103 = por %p101, %p102
      %p104 = scmp.ne.s32.totalorder %s95, %s96
      %p105 = scmp.eq.s32.totalorder %s22, 0
      %p106 = por %p104, %p105
      %p107 = scmp.ne.s32.totalorder %s95, %s96
      %p108 = scmp.eq.s32.totalorder %s23, 1
      %p109 = por %p107, %p108
      %p111 = scmp.ne.s32.totalorder %s96, %s110
      %p112 = scmp.eq.s32.totalorder %s23, 0
      %p113 = por %p111, %p112
      %s115 = sadd.s32 %s114, 1
      %p118 = scmp.eq.s32.totalorder %s17, 1
      %p119 = scmp.ne.s32.totalorder %s114, %s116
      %p120 = scmp.eq.s32.totalorder %s17, 0
      %p121 = por %p119, %p120
      %p122 = scmp.ne.s32.totalorder %s114, %s116
      %p123 = scmp.eq.s32.totalorder %s22, 1
      %p124 = por %p122, %p123
      %p125 = scmp.ne.s32.totalorder %s116, %s117
      %p126 = scmp.eq.s32.totalorder %s22, 0
      %p127 = por %p125, %p126
      %p128 = scmp.ne.s32.totalorder %s116, %s117
      %p129 = scmp.eq.s32.totalorder %s23, 1
      %p130 = por %p128, %p129
      %p132 = scmp.ne.s32.totalorder %s117, %s131
      %p133 = scmp.eq.s32.totalorder %s23, 0
      %p134 = por %p132, %p133
      %s136 = sadd.s32 %s135, 1
      %p139 = scmp.eq.s32.totalorder %s17, 1
      %p140 = scmp.ne.s32.totalorder %s135, %s137
      %p141 = scmp.eq.s32.totalorder %s17, 0
      %p142 = por %p140, %p141
      %p143 = scmp.ne.s32.totalorder %s135, %s137
      %p144 = scmp.eq.s32.totalorder %s22, 1
      %p145 = por %p143, %p144
      %p146 = scmp.ne.s32.totalorder %s137, %s138
      %p147 = scmp.eq.s32.totalorder %s22, 0
      %p148 = por %p146, %p147
      %p149 = scmp.ne.s32.totalorder %s137, %s138
      %p150 = scmp.eq.s32.totalorder %s23, 1
      %p151 = por %p149, %p150
      %p153 = scmp.ne.s32.totalorder %s138, %s152
      %p154 = scmp.eq.s32.totalorder %s23, 0
      %p155 = por %p153, %p154
      %s156 = ssub.s32 %s17, %s24
      %p157 = scmp.eq.s32.totalorder %s156, 0
      %s159 = sadd.s32 %s158, 1
      %s160 = scalar_select %p157, %s158, %s159
      %p163 = pneg %p157
      %p164 = scmp.eq.s32.totalorder %s17, 1
      %p165 = por %p163, %p164
      %p166 = scmp.ne.s32.totalorder %s158, %s161
      %p167 = scmp.eq.s32.totalorder %s17, 0
      %p168 = por %p166, %p167
      %p169 = scmp.ne.s32.totalorder %s158, %s161
      %p170 = scmp.eq.s32.totalorder %s22, 1
      %p171 = por %p169, %p170
      %p172 = scmp.ne.s32.totalorder %s161, %s162
      %p173 = scmp.eq.s32.totalorder %s22, 0
      %p174 = por %p172, %p173
      %p175 = scmp.ne.s32.totalorder %s161, %s162
      %p176 = scmp.eq.s32.totalorder %s23, 1
      %p177 = por %p175, %p176
      %p179 = scmp.ne.s32.totalorder %s162, %s178
      %p180 = scmp.eq.s32.totalorder %s23, 0
      %p181 = por %p179, %p180
      %p182 = scmp.le.s32.totalorder 1, %s17
      %p183 = scmp.lt.s32.totalorder %s17, 3
      %p184 = pnand %p182, %p183
      %p185 = pneg %p184
      // Predicated region
      $region9: #{tpu_custom_call.1} parent=5 // pred_check
        _
      $region10: #{tpu_custom_call.1} parent=5 // pred_check_branch
        %187 = sbr.rel (%p184) target = $region12
      $region11: #{tpu_custom_call.1} parent=5 // pred_region
        %s188 = ssub.s32 %s17, 1
        // Predicated region
        $region13: #{tpu_custom_call.1} parent=11 // pred_check
          %p189 = pneg %p64
        $region14: #{tpu_custom_call.1} parent=11 // pred_check_branch
          %191 = sbr.rel (%p189) target = $region16
        $region15: #{tpu_custom_call.1} parent=11 // pred_region
          %193 = vsyncadd [#allocation3], 0
          %s194 = sshll.u32 %s1, 4
          %s195 = int_to_ptr.hbm [resolvable:$true] %s194
          %s196 = sshll.u32 [#allocation2], 4
          %s197 = int_to_ptr.vmem [resolvable:$true] %s196
          %202 = dma.hbm_to_vmem [thread:$0]  %s195, 4096, %s197, [#allocation3], 256, 256, 16
        $region16: #{tpu_custom_call.1} parent=11 // pred_fallthru
          _
        // Predicated region
        $region17: #{tpu_custom_call.1} parent=11 // pred_check
          %p203 = pneg %p85
        $region18: #{tpu_custom_call.1} parent=11 // pred_check_branch
          %205 = sbr.rel (%p203) target = $region20
        $region19: #{tpu_custom_call.1} parent=11 // pred_region
          %207 = vsyncadd [#allocation6], 0
          %s208 = sshll.u32 %s2, 4
          %s209 = int_to_ptr.hbm [resolvable:$true] %s208
          %s210 = sshll.u32 [#allocation5], 4
          %s211 = int_to_ptr.vmem [resolvable:$true] %s210
          %216 = dma.hbm_to_vmem [thread:$0]  %s209, 12288, %s211, [#allocation6], 768, 768, 48
        $region20: #{tpu_custom_call.1} parent=11 // pred_fallthru
          _
        // Predicated region
        $region21: #{tpu_custom_call.1} parent=11 // pred_check
          %p217 = pneg %p106
        $region22: #{tpu_custom_call.1} parent=11 // pred_check_branch
          %219 = sbr.rel (%p217) target = $region24
        $region23: #{tpu_custom_call.1} parent=11 // pred_region
          _
        $region24: #{tpu_custom_call.1} parent=11 // pred_fallthru
          _
        // Predicated region
        $region25: #{tpu_custom_call.1} parent=11 // pred_check
          %p220 = pneg %p127
        $region26: #{tpu_custom_call.1} parent=11 // pred_check_branch
          %222 = sbr.rel (%p220) target = $region28
        $region27: #{tpu_custom_call.1} parent=11 // pred_region
          %224 = vsyncadd [#allocation6], 0
          %s225 = sshll.u32 %s4, 4
          %s226 = int_to_ptr.hbm [resolvable:$true] %s225
          %s227 = sshll.u32 [#allocation7], 4
          %s228 = int_to_ptr.vmem [resolvable:$true] %s227
          %233 = dma.hbm_to_vmem [thread:$0]  %s226, 4096, %s228, [#allocation6], 128, 128, 8
        $region28: #{tpu_custom_call.1} parent=11 // pred_fallthru
          _
        // Predicated region
        $region29: #{tpu_custom_call.1} parent=11 // pred_check
          %p234 = pneg %p148
        $region30: #{tpu_custom_call.1} parent=11 // pred_check_branch
          %236 = sbr.rel (%p234) target = $region32
        $region31: #{tpu_custom_call.1} parent=11 // pred_region
          _
        $region32: #{tpu_custom_call.1} parent=11 // pred_fallthru
          _
      $region12: #{tpu_custom_call.1} parent=5 // pred_fallthru
        _
      %p237 = scmp.lt.s32.totalorder %s17, 2
      // Predicated region
      $region33: #{tpu_custom_call.1} parent=5 // pred_check
        %p238 = pneg %p237
      $region34: #{tpu_custom_call.1} parent=5 // pred_check_branch
        %240 = sbr.rel (%p238) target = $region36
      $region35: #{tpu_custom_call.1} parent=5 // pred_region
        // Predicated region
        $region37: #{tpu_custom_call.1} parent=35 // pred_check
          %p241 = pneg %p37
        $region38: #{tpu_custom_call.1} parent=35 // pred_check_branch
          %243 = sbr.rel (%p241) target = $region40
        $region39: #{tpu_custom_call.1} parent=35 // pred_region
          %p244 = scmp.lt.s32.totalorder %s17, 1
          %s245 = scalar_select %p244, %s17, 1
          %s246 = smul.addr %s245, 8
          %s247 = scalar_lea.vmem %s0, %s246
        $region40: #{tpu_custom_call.1} parent=35 // pred_fallthru
          _
      $region36: #{tpu_custom_call.1} parent=5 // pred_fallthru
        _
      %p248 = scmp.le.s32.totalorder 1, %s17
      %p249 = scmp.lt.s32.totalorder %s17, 3
      %p250 = pnand %p248, %p249
      %p251 = pneg %p250
      // Predicated region
      $region41: #{tpu_custom_call.1} parent=5 // pred_check
        _
      $region42: #{tpu_custom_call.1} parent=5 // pred_check_branch
        %253 = sbr.rel (%p250) target = $region44
      $region43: #{tpu_custom_call.1} parent=5 // pred_region
        %s254 = ssub.s32 %s17, 1
        // Predicated region
        $region45: #{tpu_custom_call.1} parent=43 // pred_check
          %p255 = pneg %p64
        $region46: #{tpu_custom_call.1} parent=43 // pred_check_branch
          %257 = sbr.rel (%p255) target = $region48
        $region47: #{tpu_custom_call.1} parent=43 // pred_region
          %259 = dma.done [#allocation3], 4096
        $region48: #{tpu_custom_call.1} parent=43 // pred_fallthru
          _
        // Predicated region
        $region49: #{tpu_custom_call.1} parent=43 // pred_check
          %p260 = pneg %p85
        $region50: #{tpu_custom_call.1} parent=43 // pred_check_branch
          %262 = sbr.rel (%p260) target = $region52
        $region51: #{tpu_custom_call.1} parent=43 // pred_region
          %264 = dma.done [#allocation6], 12288
        $region52: #{tpu_custom_call.1} parent=43 // pred_fallthru
          _
        // Predicated region
        $region53: #{tpu_custom_call.1} parent=43 // pred_check
          %p265 = pneg %p127
        $region54: #{tpu_custom_call.1} parent=43 // pred_check_branch
          %267 = sbr.rel (%p265) target = $region56
        $region55: #{tpu_custom_call.1} parent=43 // pred_region
          %269 = dma.done [#allocation6], 4096
        $region56: #{tpu_custom_call.1} parent=43 // pred_fallthru
          _
        %p270 = scmp.lt.s32.totalorder %s22, 1
        %s271 = scalar_select %p270, %s22, 1
        %s272 = smul.addr %s271, 8
        %s273 = scalar_lea.vmem %s0, %s272
        %p274 = pneg %p43
        %p275 = pneg %p40
        %p276 = pneg %p64
        %p277 = pneg %p61
        %p278 = pneg %p85
        %p279 = pneg %p82
        %p280 = pneg %p106
        %p281 = pneg %p103
        %p282 = pneg %p127
        %p283 = pneg %p124
        %p284 = pneg %p148
        %p285 = pneg %p145
        %p286 = pneg %p174
        %p287 = pneg %p171
        %s288 = sand.u32 %s161, 1
        %s289 = scalar_lea.sflag [#allocation4], %s288
        %s290 = sand.u32 %s161, 1
        %s291 = smul.addr %s290, 8
        %s292 = scalar_lea.vmem [#allocation8], %s291
        %p293 = scmp.lt.s32.totalorder %s22, 1
        %s294 = scalar_select %p293, %s22, 1
        %s295 = smul.addr %s294, 8
        %s296 = scalar_lea.vmem %s0, %s295
        %v297 = vld [vmem:[%s296] sm:$0xff]
        %v298 = vlaneseq
        %v299 = vand.u32 %v298, 127
        %300 = vset.pattern.permute.xlu0 0
        %301 = vperm.xlu0 %300, %v297
        %v302 = vpop.permute.xlu0 %301
        %vm303 = vcmp.eq.s32.totalorder %v302, %v299
        %v304 = vsel %vm303, 1, 0
        %v305 = vcvt.s32.f32 %v304
        %v306 = vadd.f32 %v305, 0.0
        %307 = vset.pattern.permute.xlu0 1
        %308 = vperm.xlu0 %307, %v297
        %v309 = vpop.permute.xlu0 %308
        %vm310 = vcmp.eq.s32.totalorder %v309, %v299
        %v311 = vsel %vm310, 1, 0
        %v312 = vcvt.s32.f32 %v311
        %v313 = vadd.f32 %v306, %v312
        %314 = vset.pattern.permute.xlu0 2
        %315 = vperm.xlu0 %314, %v297
        %v316 = vpop.permute.xlu0 %315
        %vm317 = vcmp.eq.s32.totalorder %v316, %v299
        %v318 = vsel %vm317, 1, 0
        %v319 = vcvt.s32.f32 %v318
        %v320 = vadd.f32 %v313, %v319
        %321 = vset.pattern.permute.xlu0 3
        %322 = vperm.xlu0 %321, %v297
        %v323 = vpop.permute.xlu0 %322
        %vm324 = vcmp.eq.s32.totalorder %v323, %v299
        %v325 = vsel %vm324, 1, 0
        %v326 = vcvt.s32.f32 %v325
        %v327 = vadd.f32 %v320, %v326
        %328 = vset.pattern.permute.xlu0 4
        %329 = vperm.xlu0 %328, %v297
        %v330 = vpop.permute.xlu0 %329
        %vm331 = vcmp.eq.s32.totalorder %v330, %v299
        %v332 = vsel %vm331, 1, 0
        %v333 = vcvt.s32.f32 %v332
        %v334 = vadd.f32 %v327, %v333
        %335 = vset.pattern.permute.xlu0 5
        %336 = vperm.xlu0 %335, %v297
        %v337 = vpop.permute.xlu0 %336
        %vm338 = vcmp.eq.s32.totalorder %v337, %v299
        %v339 = vsel %vm338, 1, 0
        %v340 = vcvt.s32.f32 %v339
        %v341 = vadd.f32 %v334, %v340
        %342 = vset.pattern.permute.xlu0 6
        %343 = vperm.xlu0 %342, %v297
        %v344 = vpop.permute.xlu0 %343
        %vm345 = vcmp.eq.s32.totalorder %v344, %v299
        %v346 = vsel %vm345, 1, 0
        %v347 = vcvt.s32.f32 %v346
        %v348 = vadd.f32 %v341, %v347
        %349 = vset.pattern.permute.xlu0 7
        %350 = vperm.xlu0 %349, %v297
        %v351 = vpop.permute.xlu0 %350
        %vm352 = vcmp.eq.s32.totalorder %v351, %v299
        %v353 = vsel %vm352, 1, 0
        %v354 = vcvt.s32.f32 %v353
        %v355 = vadd.f32 %v348, %v354
        %v356 = vld [vmem:[#allocation2] sm:$0xff]
        %v357 = vld [vmem:[#allocation2 + $0x8] sm:$0xff]
        %v358 = vld [vmem:[#allocation2 + $0x10] sm:$0xff]
        %v359 = vld [vmem:[#allocation2 + $0x18] sm:$0xff]
        %v360 = vld [vmem:[#allocation2 + $0x20] sm:$0xff]
        %v361 = vld [vmem:[#allocation2 + $0x28] sm:$0xff]
        %v362 = vld [vmem:[#allocation2 + $0x30] sm:$0xff]
        %v363 = vld [vmem:[#allocation2 + $0x38] sm:$0xff]
        %v364 = vld [vmem:[#allocation2 + $0x40] sm:$0xff]
        %v365 = vld [vmem:[#allocation2 + $0x48] sm:$0xff]
        %v366 = vld [vmem:[#allocation2 + $0x50] sm:$0xff]
        %v367 = vld [vmem:[#allocation2 + $0x58] sm:$0xff]
        %v368 = vld [vmem:[#allocation2 + $0x60] sm:$0xff]
        %v369 = vld [vmem:[#allocation2 + $0x68] sm:$0xff]
        %v370 = vld [vmem:[#allocation2 + $0x70] sm:$0xff]
        %v371 = vld [vmem:[#allocation2 + $0x78] sm:$0xff]
        %v372 = vld [vmem:[#allocation2 + $0x80] sm:$0xff]
        %v373 = vld [vmem:[#allocation2 + $0x88] sm:$0xff]
        %v374 = vld [vmem:[#allocation2 + $0x90] sm:$0xff]
        %v375 = vld [vmem:[#allocation2 + $0x98] sm:$0xff]
        %v376 = vld [vmem:[#allocation2 + $0xa0] sm:$0xff]
        %v377 = vld [vmem:[#allocation2 + $0xa8] sm:$0xff]
        %v378 = vld [vmem:[#allocation2 + $0xb0] sm:$0xff]
        %v379 = vld [vmem:[#allocation2 + $0xb8] sm:$0xff]
        %v380 = vld [vmem:[#allocation2 + $0xc0] sm:$0xff]
        %v381 = vld [vmem:[#allocation2 + $0xc8] sm:$0xff]
        %v382 = vld [vmem:[#allocation2 + $0xd0] sm:$0xff]
        %v383 = vld [vmem:[#allocation2 + $0xd8] sm:$0xff]
        %v384 = vld [vmem:[#allocation2 + $0xe0] sm:$0xff]
        %v385 = vld [vmem:[#allocation2 + $0xe8] sm:$0xff]
        %v386 = vld [vmem:[#allocation2 + $0xf0] sm:$0xff]
        %v387 = vld [vmem:[#allocation2 + $0xf8] sm:$0xff]
        %388 = vmatpush.msra.mxu0 %v386
        %389 = vmatpush.msra.mxu0 %v384
        %390 = vmatpush.msra.mxu0 %v382
        %391 = vmatpush.msra.mxu0 %v380
        %392 = vmatpush.msra.mxu0 %v378
        %393 = vmatpush.msra.mxu0 %v376
        %394 = vmatpush.msra.mxu0 %v374
        %395 = vmatpush.msra.mxu0 %v372
        %396 = vmatpush.msra.mxu0 %v370
        %397 = vmatpush.msra.mxu0 %v368
        %398 = vmatpush.msra.mxu0 %v366
        %399 = vmatpush.msra.mxu0 %v364
        %400 = vmatpush.msra.mxu0 %v362
        %401 = vmatpush.msra.mxu0 %v360
        %402 = vmatpush.msra.mxu0 %v358
        %403 = vmatpush.msra.mxu0 %v356
        %404 = vmatmul.f32.gmra.mxu0 %v355
        %v405 = vpop.f32.mrf.mxu0
        %v406 = vadd.f32 0.0, %v405
        %407 = vdwg.mxu0
        %408 = vmatpush.msra.mxu0 %v387
        %409 = vmatpush.msra.mxu0 %v385
        %410 = vmatpush.msra.mxu0 %v383
        %411 = vmatpush.msra.mxu0 %v381
        %412 = vmatpush.msra.mxu0 %v379
        %413 = vmatpush.msra.mxu0 %v377
        %414 = vmatpush.msra.mxu0 %v375
        %415 = vmatpush.msra.mxu0 %v373
        %416 = vmatpush.msra.mxu0 %v371
        %417 = vmatpush.msra.mxu0 %v369
        %418 = vmatpush.msra.mxu0 %v367
        %419 = vmatpush.msra.mxu0 %v365
        %420 = vmatpush.msra.mxu0 %v363
        %421 = vmatpush.msra.mxu0 %v361
        %422 = vmatpush.msra.mxu0 %v359
        %423 = vmatpush.msra.mxu0 %v357
        %424 = vmatmul.f32.gmra.mxu0 %v355
        %v425 = vpop.f32.mrf.mxu0
        %v426 = vadd.f32 0.0, %v425
        %427 = vdwg.mxu0
        %v428 = vld [vmem:[#allocation5] sm:$0xff]
        %v429 = vld [vmem:[#allocation5 + $0x8] sm:$0xff]
        %v430 = vld [vmem:[#allocation5 + $0x10] sm:$0xff]
        %v431 = vld [vmem:[#allocation5 + $0x18] sm:$0xff]
        %v432 = vld [vmem:[#allocation5 + $0x20] sm:$0xff]
        %v433 = vld [vmem:[#allocation5 + $0x28] sm:$0xff]
        %v434 = vld [vmem:[#allocation5 + $0x30] sm:$0xff]
        %v435 = vld [vmem:[#allocation5 + $0x38] sm:$0xff]
        %v436 = vld [vmem:[#allocation5 + $0x40] sm:$0xff]
        %v437 = vld [vmem:[#allocation5 + $0x48] sm:$0xff]
        %v438 = vld [vmem:[#allocation5 + $0x50] sm:$0xff]
        %v439 = vld [vmem:[#allocation5 + $0x58] sm:$0xff]
        %v440 = vld [vmem:[#allocation5 + $0x60] sm:$0xff]
        %v441 = vld [vmem:[#allocation5 + $0x68] sm:$0xff]
        %v442 = vld [vmem:[#allocation5 + $0x70] sm:$0xff]
        %v443 = vld [vmem:[#allocation5 + $0x78] sm:$0xff]
        %v444 = vld [vmem:[#allocation5 + $0x80] sm:$0xff]
        %v445 = vld [vmem:[#allocation5 + $0x88] sm:$0xff]
        %v446 = vld [vmem:[#allocation5 + $0x90] sm:$0xff]
        %v447 = vld [vmem:[#allocation5 + $0x98] sm:$0xff]
        %v448 = vld [vmem:[#allocation5 + $0xa0] sm:$0xff]
        %v449 = vld [vmem:[#allocation5 + $0xa8] sm:$0xff]
        %v450 = vld [vmem:[#allocation5 + $0xb0] sm:$0xff]
        %v451 = vld [vmem:[#allocation5 + $0xb8] sm:$0xff]
        %v452 = vld [vmem:[#allocation5 + $0xc0] sm:$0xff]
        %v453 = vld [vmem:[#allocation5 + $0xc8] sm:$0xff]
        %v454 = vld [vmem:[#allocation5 + $0xd0] sm:$0xff]
        %v455 = vld [vmem:[#allocation5 + $0xd8] sm:$0xff]
        %v456 = vld [vmem:[#allocation5 + $0xe0] sm:$0xff]
        %v457 = vld [vmem:[#allocation5 + $0xe8] sm:$0xff]
        %v458 = vld [vmem:[#allocation5 + $0xf0] sm:$0xff]
        %v459 = vld [vmem:[#allocation5 + $0xf8] sm:$0xff]
        %v460 = vld [vmem:[#allocation5 + $0x100] sm:$0xff]
        %v461 = vld [vmem:[#allocation5 + $0x108] sm:$0xff]
        %v462 = vld [vmem:[#allocation5 + $0x110] sm:$0xff]
        %v463 = vld [vmem:[#allocation5 + $0x118] sm:$0xff]
        %v464 = vld [vmem:[#allocation5 + $0x120] sm:$0xff]
        %v465 = vld [vmem:[#allocation5 + $0x128] sm:$0xff]
        %v466 = vld [vmem:[#allocation5 + $0x130] sm:$0xff]
        %v467 = vld [vmem:[#allocation5 + $0x138] sm:$0xff]
        %v468 = vld [vmem:[#allocation5 + $0x140] sm:$0xff]
        %v469 = vld [vmem:[#allocation5 + $0x148] sm:$0xff]
        %v470 = vld [vmem:[#allocation5 + $0x150] sm:$0xff]
        %v471 = vld [vmem:[#allocation5 + $0x158] sm:$0xff]
        %v472 = vld [vmem:[#allocation5 + $0x160] sm:$0xff]
        %v473 = vld [vmem:[#allocation5 + $0x168] sm:$0xff]
        %v474 = vld [vmem:[#allocation5 + $0x170] sm:$0xff]
        %v475 = vld [vmem:[#allocation5 + $0x178] sm:$0xff]
        %v476 = vld [vmem:[#allocation5 + $0x180] sm:$0xff]
        %v477 = vld [vmem:[#allocation5 + $0x188] sm:$0xff]
        %v478 = vld [vmem:[#allocation5 + $0x190] sm:$0xff]
        %v479 = vld [vmem:[#allocation5 + $0x198] sm:$0xff]
        %v480 = vld [vmem:[#allocation5 + $0x1a0] sm:$0xff]
        %v481 = vld [vmem:[#allocation5 + $0x1a8] sm:$0xff]
        %v482 = vld [vmem:[#allocation5 + $0x1b0] sm:$0xff]
        %v483 = vld [vmem:[#allocation5 + $0x1b8] sm:$0xff]
        %v484 = vld [vmem:[#allocation5 + $0x1c0] sm:$0xff]
        %v485 = vld [vmem:[#allocation5 + $0x1c8] sm:$0xff]
        %v486 = vld [vmem:[#allocation5 + $0x1d0] sm:$0xff]
        %v487 = vld [vmem:[#allocation5 + $0x1d8] sm:$0xff]
        %v488 = vld [vmem:[#allocation5 + $0x1e0] sm:$0xff]
        %v489 = vld [vmem:[#allocation5 + $0x1e8] sm:$0xff]
        %v490 = vld [vmem:[#allocation5 + $0x1f0] sm:$0xff]
        %v491 = vld [vmem:[#allocation5 + $0x1f8] sm:$0xff]
        %v492 = vld [vmem:[#allocation5 + $0x200] sm:$0xff]
        %v493 = vld [vmem:[#allocation5 + $0x208] sm:$0xff]
        %v494 = vld [vmem:[#allocation5 + $0x210] sm:$0xff]
        %v495 = vld [vmem:[#allocation5 + $0x218] sm:$0xff]
        %v496 = vld [vmem:[#allocation5 + $0x220] sm:$0xff]
        %v497 = vld [vmem:[#allocation5 + $0x228] sm:$0xff]
        %v498 = vld [vmem:[#allocation5 + $0x230] sm:$0xff]
        %v499 = vld [vmem:[#allocation5 + $0x238] sm:$0xff]
        %v500 = vld [vmem:[#allocation5 + $0x240] sm:$0xff]
        %v501 = vld [vmem:[#allocation5 + $0x248] sm:$0xff]
        %v502 = vld [vmem:[#allocation5 + $0x250] sm:$0xff]
        %v503 = vld [vmem:[#allocation5 + $0x258] sm:$0xff]
        %v504 = vld [vmem:[#allocation5 + $0x260] sm:$0xff]
        %v505 = vld [vmem:[#allocation5 + $0x268] sm:$0xff]
        %v506 = vld [vmem:[#allocation5 + $0x270] sm:$0xff]
        %v507 = vld [vmem:[#allocation5 + $0x278] sm:$0xff]
        %v508 = vld [vmem:[#allocation5 + $0x280] sm:$0xff]
        %v509 = vld [vmem:[#allocation5 + $0x288] sm:$0xff]
        %v510 = vld [vmem:[#allocation5 + $0x290] sm:$0xff]
        %v511 = vld [vmem:[#allocation5 + $0x298] sm:$0xff]
        %v512 = vld [vmem:[#allocation5 + $0x2a0] sm:$0xff]
        %v513 = vld [vmem:[#allocation5 + $0x2a8] sm:$0xff]
        %v514 = vld [vmem:[#allocation5 + $0x2b0] sm:$0xff]
        %v515 = vld [vmem:[#allocation5 + $0x2b8] sm:$0xff]
        %v516 = vld [vmem:[#allocation5 + $0x2c0] sm:$0xff]
        %v517 = vld [vmem:[#allocation5 + $0x2c8] sm:$0xff]
        %v518 = vld [vmem:[#allocation5 + $0x2d0] sm:$0xff]
        %v519 = vld [vmem:[#allocation5 + $0x2d8] sm:$0xff]
        %v520 = vld [vmem:[#allocation5 + $0x2e0] sm:$0xff]
        %v521 = vld [vmem:[#allocation5 + $0x2e8] sm:$0xff]
        %v522 = vld [vmem:[#allocation5 + $0x2f0] sm:$0xff]
        %v523 = vld [vmem:[#allocation5 + $0x2f8] sm:$0xff]
        %v524 = vld [vmem:[%s3] sm:$0x3f]
        %v526 = vperm.slane %v524, 0
        %v527 = vperm.slane %v524, 1
        %v528 = vperm.slane %v524, 2
        %v529 = vperm.slane %v524, 3
        %v530 = vperm.slane %v524, 4
        %v531 = vperm.slane %v524, 5
        %538 = vmatpush.msra.mxu0 %v518
        %539 = vmatpush.msra.mxu0 %v512
        %540 = vmatpush.msra.mxu0 %v506
        %541 = vmatpush.msra.mxu0 %v500
        %542 = vmatpush.msra.mxu0 %v494
        %543 = vmatpush.msra.mxu0 %v488
        %544 = vmatpush.msra.mxu0 %v482
        %545 = vmatpush.msra.mxu0 %v476
        %546 = vmatpush.msra.mxu0 %v470
        %547 = vmatpush.msra.mxu0 %v464
        %548 = vmatpush.msra.mxu0 %v458
        %549 = vmatpush.msra.mxu0 %v452
        %550 = vmatpush.msra.mxu0 %v446
        %551 = vmatpush.msra.mxu0 %v440
        %552 = vmatpush.msra.mxu0 %v434
        %553 = vmatpush.msra.mxu0 %v428
        %554 = vmatmul.f32.gmra.mxu0 %v426
        %v555 = vpop.f32.mrf.mxu0
        %v556 = vadd.f32 %v526, %v555
        %557 = vdwg.mxu0
        %558 = vmatpush.msra.mxu0 %v519
        %559 = vmatpush.msra.mxu0 %v513
        %560 = vmatpush.msra.mxu0 %v507
        %561 = vmatpush.msra.mxu0 %v501
        %562 = vmatpush.msra.mxu0 %v495
        %563 = vmatpush.msra.mxu0 %v489
        %564 = vmatpush.msra.mxu0 %v483
        %565 = vmatpush.msra.mxu0 %v477
        %566 = vmatpush.msra.mxu0 %v471
        %567 = vmatpush.msra.mxu0 %v465
        %568 = vmatpush.msra.mxu0 %v459
        %569 = vmatpush.msra.mxu0 %v453
        %570 = vmatpush.msra.mxu0 %v447
        %571 = vmatpush.msra.mxu0 %v441
        %572 = vmatpush.msra.mxu0 %v435
        %573 = vmatpush.msra.mxu0 %v429
        %574 = vmatmul.f32.gmra.mxu0 %v426
        %v575 = vpop.f32.mrf.mxu0
        %v576 = vadd.f32 %v527, %v575
        %577 = vdwg.mxu0
        %578 = vmatpush.msra.mxu0 %v520
        %579 = vmatpush.msra.mxu0 %v514
        %580 = vmatpush.msra.mxu0 %v508
        %581 = vmatpush.msra.mxu0 %v502
        %582 = vmatpush.msra.mxu0 %v496
        %583 = vmatpush.msra.mxu0 %v490
        %584 = vmatpush.msra.mxu0 %v484
        %585 = vmatpush.msra.mxu0 %v478
        %586 = vmatpush.msra.mxu0 %v472
        %587 = vmatpush.msra.mxu0 %v466
        %588 = vmatpush.msra.mxu0 %v460
        %589 = vmatpush.msra.mxu0 %v454
        %590 = vmatpush.msra.mxu0 %v448
        %591 = vmatpush.msra.mxu0 %v442
        %592 = vmatpush.msra.mxu0 %v436
        %593 = vmatpush.msra.mxu0 %v430
        %594 = vmatmul.f32.gmra.mxu0 %v426
        %v595 = vpop.f32.mrf.mxu0
        %v596 = vadd.f32 %v528, %v595
        %597 = vdwg.mxu0
        %598 = vmatpush.msra.mxu0 %v521
        %599 = vmatpush.msra.mxu0 %v515
        %600 = vmatpush.msra.mxu0 %v509
        %601 = vmatpush.msra.mxu0 %v503
        %602 = vmatpush.msra.mxu0 %v497
        %603 = vmatpush.msra.mxu0 %v491
        %604 = vmatpush.msra.mxu0 %v485
        %605 = vmatpush.msra.mxu0 %v479
        %606 = vmatpush.msra.mxu0 %v473
        %607 = vmatpush.msra.mxu0 %v467
        %608 = vmatpush.msra.mxu0 %v461
        %609 = vmatpush.msra.mxu0 %v455
        %610 = vmatpush.msra.mxu0 %v449
        %611 = vmatpush.msra.mxu0 %v443
        %612 = vmatpush.msra.mxu0 %v437
        %613 = vmatpush.msra.mxu0 %v431
        %614 = vmatmul.f32.gmra.mxu0 %v426
        %v615 = vpop.f32.mrf.mxu0
        %v616 = vadd.f32 %v529, %v615
        %617 = vdwg.mxu0
        %618 = vmatpush.msra.mxu0 %v522
        %619 = vmatpush.msra.mxu0 %v516
        %620 = vmatpush.msra.mxu0 %v510
        %621 = vmatpush.msra.mxu0 %v504
        %622 = vmatpush.msra.mxu0 %v498
        %623 = vmatpush.msra.mxu0 %v492
        %624 = vmatpush.msra.mxu0 %v486
        %625 = vmatpush.msra.mxu0 %v480
        %626 = vmatpush.msra.mxu0 %v474
        %627 = vmatpush.msra.mxu0 %v468
        %628 = vmatpush.msra.mxu0 %v462
        %629 = vmatpush.msra.mxu0 %v456
        %630 = vmatpush.msra.mxu0 %v450
        %631 = vmatpush.msra.mxu0 %v444
        %632 = vmatpush.msra.mxu0 %v438
        %633 = vmatpush.msra.mxu0 %v432
        %634 = vmatmul.f32.gmra.mxu0 %v426
        %v635 = vpop.f32.mrf.mxu0
        %v636 = vadd.f32 %v530, %v635
        %637 = vdwg.mxu0
        %638 = vmatpush.msra.mxu0 %v523
        %639 = vmatpush.msra.mxu0 %v517
        %640 = vmatpush.msra.mxu0 %v511
        %641 = vmatpush.msra.mxu0 %v505
        %642 = vmatpush.msra.mxu0 %v499
        %643 = vmatpush.msra.mxu0 %v493
        %644 = vmatpush.msra.mxu0 %v487
        %645 = vmatpush.msra.mxu0 %v481
        %646 = vmatpush.msra.mxu0 %v475
        %647 = vmatpush.msra.mxu0 %v469
        %648 = vmatpush.msra.mxu0 %v463
        %649 = vmatpush.msra.mxu0 %v457
        %650 = vmatpush.msra.mxu0 %v451
        %651 = vmatpush.msra.mxu0 %v445
        %652 = vmatpush.msra.mxu0 %v439
        %653 = vmatpush.msra.mxu0 %v433
        %654 = vmatmul.f32.gmra.mxu0 %v426
        %v655 = vpop.f32.mrf.mxu0
        %v656 = vadd.f32 %v531, %v655
        %657 = vdwg.mxu0
        %v658 = vxor.u32 %v556, 2147483648
        %v659 = vxor.u32 %v576, 2147483648
        %v660 = vmul.f32 %v658, 1.442695
        %v661 = vpow.pop %v660
        %v662 = vmul.f32 %v659, 1.442695
        %v663 = vpow.pop %v662
        %v664 = vadd.f32 %v661, 1.0
        %v665 = vadd.f32 %v663, 1.0
        %v666 = vrcp.pop %v664
        %v667 = vmul.f32 %v664, %v666
        %v668 = vsub.f32 1.0, %v667
        %v669 = vmul.f32 %v666, %v668
        %v670 = vadd.f32 %v666, %v669
        %vm671 = vweird.f32 %v664
        %vm672 = vweird.f32 %v666
        %vm673 = vmor %vm671, %vm672
        %v674 = vsel %vm673, %v666, %v670
        %v675 = vand.u32 2147483647, %v664
        %vm676 = vcmp.eq.f32.partialorder %v675, 8.507059e+37
        %v677 = vand.u32 %v664, 2147483648
        %v678 = vor.u32 1.1754944e-38, %v677
        %v679 = vsel %vm676, %v678, %v674
        %v680 = vmul.f32 1.0, %v679
        %v681 = vrcp.pop %v665
        %v682 = vmul.f32 %v665, %v681
        %v683 = vsub.f32 1.0, %v682
        %v684 = vmul.f32 %v681, %v683
        %v685 = vadd.f32 %v681, %v684
        %vm686 = vweird.f32 %v665
        %vm687 = vweird.f32 %v681
        %vm688 = vmor %vm686, %vm687
        %v689 = vsel %vm688, %v681, %v685
        %v690 = vand.u32 2147483647, %v665
        %vm691 = vcmp.eq.f32.partialorder %v690, 8.507059e+37
        %v692 = vand.u32 %v665, 2147483648
        %v693 = vor.u32 1.1754944e-38, %v692
        %v694 = vsel %vm691, %v693, %v689
        %v695 = vmul.f32 1.0, %v694
        %v696 = vtanh.pop %v596
        %v697 = vtanh.pop %v616
        %v698 = vxor.u32 %v636, 2147483648
        %v699 = vxor.u32 %v656, 2147483648
        %v700 = vmul.f32 %v698, 1.442695
        %v701 = vpow.pop %v700
        %v702 = vmul.f32 %v699, 1.442695
        %v703 = vpow.pop %v702
        %v704 = vadd.f32 %v701, 1.0
        %v705 = vadd.f32 %v703, 1.0
        %v706 = vrcp.pop %v704
        %v707 = vmul.f32 %v704, %v706
        %v708 = vsub.f32 1.0, %v707
        %v709 = vmul.f32 %v706, %v708
        %v710 = vadd.f32 %v706, %v709
        %vm711 = vweird.f32 %v704
        %vm712 = vweird.f32 %v706
        %vm713 = vmor %vm711, %vm712
        %v714 = vsel %vm713, %v706, %v710
        %v715 = vand.u32 2147483647, %v704
        %vm716 = vcmp.eq.f32.partialorder %v715, 8.507059e+37
        %v717 = vand.u32 %v704, 2147483648
        %v718 = vor.u32 1.1754944e-38, %v717
        %v719 = vsel %vm716, %v718, %v714
        %v720 = vmul.f32 1.0, %v719
        %v721 = vrcp.pop %v705
        %v722 = vmul.f32 %v705, %v721
        %v723 = vsub.f32 1.0, %v722
        %v724 = vmul.f32 %v721, %v723
        %v725 = vadd.f32 %v721, %v724
        %vm726 = vweird.f32 %v705
        %vm727 = vweird.f32 %v721
        %vm728 = vmor %vm726, %vm727
        %v729 = vsel %vm728, %v721, %v725
        %v730 = vand.u32 2147483647, %v705
        %vm731 = vcmp.eq.f32.partialorder %v730, 8.507059e+37
        %v732 = vand.u32 %v705, 2147483648
        %v733 = vor.u32 1.1754944e-38, %v732
        %v734 = vsel %vm731, %v733, %v729
        %v735 = vmul.f32 1.0, %v734
        %v736 = vmul.f32 %v680, %v696
        %v737 = vmul.f32 %v695, %v697
        %v738 = vtanh.pop %v736
        %v739 = vtanh.pop %v737
        %v740 = vmul.f32 %v720, %v738
        %v741 = vmul.f32 %v735, %v739
        %v742 = vld [vmem:[#allocation7] sm:$0xff]
        %v743 = vld [vmem:[#allocation7 + $0x8] sm:$0xff]
        %v744 = vld [vmem:[#allocation7 + $0x10] sm:$0xff]
        %v745 = vld [vmem:[#allocation7 + $0x18] sm:$0xff]
        %v746 = vld [vmem:[#allocation7 + $0x20] sm:$0xff]
        %v747 = vld [vmem:[#allocation7 + $0x28] sm:$0xff]
        %v748 = vld [vmem:[#allocation7 + $0x30] sm:$0xff]
        %v749 = vld [vmem:[#allocation7 + $0x38] sm:$0xff]
        %v750 = vld [vmem:[#allocation7 + $0x40] sm:$0xff]
        %v751 = vld [vmem:[#allocation7 + $0x48] sm:$0xff]
        %v752 = vld [vmem:[#allocation7 + $0x50] sm:$0xff]
        %v753 = vld [vmem:[#allocation7 + $0x58] sm:$0xff]
        %v754 = vld [vmem:[#allocation7 + $0x60] sm:$0xff]
        %v755 = vld [vmem:[#allocation7 + $0x68] sm:$0xff]
        %v756 = vld [vmem:[#allocation7 + $0x70] sm:$0xff]
        %v757 = vld [vmem:[#allocation7 + $0x78] sm:$0xff]
        %v758 = vld [vmem:[#allocation7 + $0x80] sm:$0xff]
        %v759 = vld [vmem:[#allocation7 + $0x88] sm:$0xff]
        %v760 = vld [vmem:[#allocation7 + $0x90] sm:$0xff]
        %v761 = vld [vmem:[#allocation7 + $0x98] sm:$0xff]
        %v762 = vld [vmem:[#allocation7 + $0xa0] sm:$0xff]
        %v763 = vld [vmem:[#allocation7 + $0xa8] sm:$0xff]
        %v764 = vld [vmem:[#allocation7 + $0xb0] sm:$0xff]
        %v765 = vld [vmem:[#allocation7 + $0xb8] sm:$0xff]
        %v766 = vld [vmem:[#allocation7 + $0xc0] sm:$0xff]
        %v767 = vld [vmem:[#allocation7 + $0xc8] sm:$0xff]
        %v768 = vld [vmem:[#allocation7 + $0xd0] sm:$0xff]
        %v769 = vld [vmem:[#allocation7 + $0xd8] sm:$0xff]
        %v770 = vld [vmem:[#allocation7 + $0xe0] sm:$0xff]
        %v771 = vld [vmem:[#allocation7 + $0xe8] sm:$0xff]
        %v772 = vld [vmem:[#allocation7 + $0xf0] sm:$0xff]
        %v773 = vld [vmem:[#allocation7 + $0xf8] sm:$0xff]
        %v774 = vld [vmem:[%s5] sm:$0x1]
        %v776 = vperm.slane %v774, 0
        %778 = vmatpush.msra.mxu0 %v757
        %779 = vmatpush.msra.mxu0 %v756
        %780 = vmatpush.msra.mxu0 %v755
        %781 = vmatpush.msra.mxu0 %v754
        %782 = vmatpush.msra.mxu0 %v753
        %783 = vmatpush.msra.mxu0 %v752
        %784 = vmatpush.msra.mxu0 %v751
        %785 = vmatpush.msra.mxu0 %v750
        %786 = vmatpush.msra.mxu0 %v749
        %787 = vmatpush.msra.mxu0 %v748
        %788 = vmatpush.msra.mxu0 %v747
        %789 = vmatpush.msra.mxu0 %v746
        %790 = vmatpush.msra.mxu0 %v745
        %791 = vmatpush.msra.mxu0 %v744
        %792 = vmatpush.msra.mxu0 %v743
        %793 = vmatpush.msra.mxu0 %v742
        %794 = vmatmul.f32.gmra.mxu0 %v740
        %v795 = vpop.f32.mrf.mxu0
        %v796 = vadd.f32 %v776, %v795
        %797 = vdwg.mxu0
        %798 = vmatpush.msra.mxu0 %v773
        %799 = vmatpush.msra.mxu0 %v772
        %800 = vmatpush.msra.mxu0 %v771
        %801 = vmatpush.msra.mxu0 %v770
        %802 = vmatpush.msra.mxu0 %v769
        %803 = vmatpush.msra.mxu0 %v768
        %804 = vmatpush.msra.mxu0 %v767
        %805 = vmatpush.msra.mxu0 %v766
        %806 = vmatpush.msra.mxu0 %v765
        %807 = vmatpush.msra.mxu0 %v764
        %808 = vmatpush.msra.mxu0 %v763
        %809 = vmatpush.msra.mxu0 %v762
        %810 = vmatpush.msra.mxu0 %v761
        %811 = vmatpush.msra.mxu0 %v760
        %812 = vmatpush.msra.mxu0 %v759
        %813 = vmatpush.msra.mxu0 %v758
        %814 = vmatmul.f32.gmra.mxu0 %v741
        %v815 = vpop.f32.mrf.mxu0
        %v816 = vadd.f32 %v796, %v815
        %817 = vdwg.mxu0
        %v818 = vadd.f32 %v406, %v816
        %v819 = vmul.f32 %v818, 0.5
        %820 = vst [vmem:[%s292] sm:$0xff] %v819
        %s821 = sand.u32 %s161, 1
        %s822 = scalar_lea.sflag [#allocation4], %s821
        %s823 = sand.u32 %s161, 1
        %s824 = smul.addr %s823, 8
        %s825 = scalar_lea.vmem [#allocation8], %s824
        // Predicated region
        $region57: #{tpu_custom_call.1} parent=43 // pred_check
          %p826 = pneg %p171
        $region58: #{tpu_custom_call.1} parent=43 // pred_check_branch
          %828 = sbr.rel (%p826) target = $region60
        $region59: #{tpu_custom_call.1} parent=43 // pred_region
          %830 = vsyncadd %s822, 0
          %s831 = smul.addr %s22, 8
          %s832 = scalar_lea.hbm %s6, %s831
          %s834 = sshll.u32 %s825, 4
          %s835 = int_to_ptr.vmem [resolvable:$true] %s834
          %s836 = sshll.u32 %s832, 4
          %s837 = int_to_ptr.hbm [resolvable:$true] %s836
          %839 = dma.vmem_to_hbm [thread:$0]  %s835, 128, %s837, %s822
        $region60: #{tpu_custom_call.1} parent=43 // pred_fallthru
          _
      $region44: #{tpu_custom_call.1} parent=5 // pred_fallthru
        _
      %p840 = scmp.le.s32.totalorder 2, %s17
      // Predicated region
      $region61: #{tpu_custom_call.1} parent=5 // pred_check
        %p841 = pneg %p840
      $region62: #{tpu_custom_call.1} parent=5 // pred_check_branch
        %843 = sbr.rel (%p841) target = $region64
      $region63: #{tpu_custom_call.1} parent=5 // pred_region
        %s844 = ssub.s32 %s17, 2
        // Predicated region
        $region65: #{tpu_custom_call.1} parent=63 // pred_check
          %p845 = pneg %p177
        $region66: #{tpu_custom_call.1} parent=63 // pred_check_branch
          %847 = sbr.rel (%p845) target = $region68
        $region67: #{tpu_custom_call.1} parent=63 // pred_region
          %s848 = sand.u32 %s162, 1
          %s849 = scalar_lea.sflag [#allocation4], %s848
          %s850 = sand.u32 %s162, 1
          %s851 = smul.addr %s850, 8
          %s852 = scalar_lea.vmem [#allocation8], %s851
          %854 = dma.done %s849, 128
        $region68: #{tpu_custom_call.1} parent=63 // pred_fallthru
          _
      $region64: #{tpu_custom_call.1} parent=5 // pred_fallthru
        _
    $region6: #{tpu_custom_call.1} parent=1 // loop_footer
      %s21 = sadd.s32 1, %s17
    $region7: #{tpu_custom_call.1} parent=1 // loop_footer_branch
      %16 = sbr.rel target = $region3
    $region8: #{tpu_custom_call.1} parent=1 // loop_exit
      _
    %855 = vsyncpa [#allocation3], 1
    %s856 = scalar_lea.sflag [#allocation3], 1
    %857 = vsyncpa %s856, 1
    %858 = vsyncpa [#allocation6], 1
    %859 = vsyncpa [#allocation4], 1
    %s860 = scalar_lea.sflag [#allocation4], 1
    %861 = vsyncpa %s860, 1

</llo_original>
